<compile_context>
chip_gen: v6e
topology: v6e:2x2x1
jax: 0.10.0
libtpu: 0.0.40
codegen_flags: <defaults>
</compile_context>

<pallas_src>
from functools import partial

import jax
import jax.numpy as jnp
import numpy as np
from jax.experimental import pallas as pl
from jax.experimental.pallas import tpu as pltpu

SMOOTH_NR = 1e-5
SMOOTH_DR = 1e-5


def _dice_partial_kernel(x_ref, t_ref, inter_ref, denom_ref, *,
                         num_fg: int, hw: int, tile_hw: int, local_w: int,
                         tiles_per_group: int, groups_per_image: int,
                         needs_mask: bool):
    """One (g, k) grid step.

    x_ref, t_ref : (1, C, tile_hw) blocks in VMEM (logits / target).
    inter_ref    : (1, C, 1) f32 output block, resident across the k axis (accumulated).
    denom_ref    : (1, C, 1) f32 output block, resident across the k axis (accumulated).
    """
    k = pl.program_id(1)

    @pl.when(k == 0)
    def _init():
        inter_ref[...] = jnp.zeros_like(inter_ref)
        denom_ref[...] = jnp.zeros_like(denom_ref)

    n_slices = tile_hw // local_w

    if needs_mask:
        # Global tile index along the flattened spatial axis for this grid step.
        if groups_per_image > 1:
            p = pl.program_id(0) % groups_per_image
            tile_idx = p * tiles_per_group + k
        else:
            tile_idx = k
        valid_in_tile = hw - tile_idx * tile_hw          # may be <= 0 or > tile_hw
        lane = jax.lax.broadcasted_iota(jnp.int32, (1, local_w), 1)   # hoisted

    # Narrow in-register accumulators (pure VPU adds inside the slice loop).
    li_fg = jnp.zeros((num_fg, local_w), jnp.float32)
    ld_fg = jnp.zeros((num_fg, local_w), jnp.float32)
    li_bg = jnp.zeros((1, local_w), jnp.float32)
    ld_bg = jnp.zeros((1, local_w), jnp.float32)

    for j in range(n_slices):                            # static, aligned lane slices
        sl = pl.ds(j * local_w, local_w)
        xs = x_ref[0, :, sl].astype(jnp.float32)         # (C, local_w)
        ts = t_ref[0, :, sl].astype(jnp.float32)         # (C, local_w)  bf16/int8 upcast

        # channel softmax over the first C-1 channels (sublane axis), exact divide
        logits = xs[:num_fg, :]
        m = jnp.max(logits, axis=0, keepdims=True)
        e = jnp.exp(logits - m)
        p_fg = e / jnp.sum(e, axis=0, keepdims=True)     # (C-1, local_w)

        # sigmoid on the last channel: one EUP push instead of exp + reciprocal
        p_bg = 0.5 * (jnp.tanh(0.5 * xs[num_fg:, :]) + 1.0)   # (1, local_w)

        t_fg = ts[:num_fg, :]
        t_bg = ts[num_fg:, :]

        if needs_mask:
            # Zero out lanes beyond H*W (partial edge tile or fully-duplicated tile).
            mask = lane < (valid_in_tile - j * local_w)
            p_fg = jnp.where(mask, p_fg, 0.0)
            p_bg = jnp.where(mask, p_bg, 0.0)
            t_fg = jnp.where(mask, t_fg, 0.0)
            t_bg = jnp.where(mask, t_bg, 0.0)

        li_fg = li_fg + p_fg * t_fg
        ld_fg = ld_fg + p_fg + t_fg
        li_bg = li_bg + p_bg * t_bg
        ld_bg = ld_bg + p_bg + t_bg

    # One tiny XLU reduce + (C, 1) output RMW per tile.
    inter_tile = jnp.concatenate(
        [jnp.sum(li_fg, axis=1, keepdims=True),
         jnp.sum(li_bg, axis=1, keepdims=True)], axis=0)          # (C, 1)
    denom_tile = jnp.concatenate(
        [jnp.sum(ld_fg, axis=1, keepdims=True),
         jnp.sum(ld_bg, axis=1, keepdims=True)], axis=0)          # (C, 1)

    inter_ref[0] += inter_tile
    denom_ref[0] += denom_tile


def _padded_rows(c: int, dtype) -> int:
    """Sublane-padded row count for a (c, lanes) tile of `dtype` (packing-aware)."""
    itemsize = jnp.dtype(dtype).itemsize
    sub = 8 * max(1, 4 // itemsize)          # f32 -> 8, bf16 -> 16, int8 -> 32
    return -(-c // sub) * sub


def _pick_tile_hw(hw: int, per_lane_bytes: int, *, max_tile: int, budget: int) -> int:
    """Lane-tile width from a double-buffered VMEM input budget (multiple of 128/512)."""
    if hw <= 128:
        return hw                             # block equal to the full dim is always legal
    cap = budget // (2 * per_lane_bytes)      # 2x for double-buffered input blocks
    cap = max(128, min(cap, max_tile, hw))
    if cap >= 512:
        return (cap // 512) * 512
    return (cap // 128) * 128


def segmentation_loss(x: jax.Array, target: jax.Array, *,
                      max_tile_hw: int = 32768,
                      input_vmem_budget: int = 24 * 1024 * 1024) -> jax.Array:
    """x: (N, C, H, W) logits; target: (N, C, H, W) one-hot/binary (f32, bf16 or int8).

    Returns MONAI DiceLoss(include_background=True, reduction='none') of
    [softmax(x[:, :-1], axis=1), sigmoid(x[:, -1])] vs target, shape (N, C, 1, 1).
    """
    N, C, H, W = x.shape
    assert C >= 2, "need at least one softmax channel plus the sigmoid channel"
    HW = H * W

    per_lane_bytes = (_padded_rows(C, x.dtype) * jnp.dtype(x.dtype).itemsize
                      + _padded_rows(C, target.dtype) * jnp.dtype(target.dtype).itemsize)
    tile_hw = _pick_tile_hw(HW, per_lane_bytes, max_tile=max_tile_hw,
                            budget=input_vmem_budget)

    num_k_total = -(-HW // tile_hw)                         # cdiv
    # Megacore coverage on v7x: if N == 1, split the spatial axis across 2 groups.
    P = 2 if (N == 1 and num_k_total >= 2) else 1
    tiles_per_group = -(-num_k_total // P)
    covered = P * tiles_per_group * tile_hw
    needs_mask = covered != HW
    need_clamp = P * tiles_per_group > num_k_total
    last_blk = num_k_total - 1
    local_w = 512 if tile_hw % 512 == 0 else (128 if tile_hw % 128 == 0 else tile_hw)

    G = N * P
    xf = x.reshape(N, C, HW)
    tf = target.reshape(N, C, HW)

    if P == 1:
        def in_map(g, k):
            return (g, 0, k)
    else:
        def in_map(g, k):
            blk = (g % P) * tiles_per_group + k
            if need_clamp:                    # duplicated tile; fully masked in-kernel
                blk = jnp.minimum(blk, last_blk)
            return (g // P, 0, blk)

    out_map = lambda g, k: (g, 0, 0)

    kernel = partial(_dice_partial_kernel, num_fg=C - 1, hw=HW, tile_hw=tile_hw,
                     local_w=local_w, tiles_per_group=tiles_per_group,
                     groups_per_image=P, needs_mask=needs_mask)

    inter, denom = pl.pallas_call(
        kernel,
        out_shape=(jax.ShapeDtypeStruct((G, C, 1), jnp.float32),
                   jax.ShapeDtypeStruct((G, C, 1), jnp.float32)),
        grid_spec=pltpu.PrefetchScalarGridSpec(
            num_scalar_prefetch=0,
            grid=(G, tiles_per_group),                    # reduction (HW) axis last
            in_specs=[
                pl.BlockSpec((1, C, tile_hw), in_map),
                pl.BlockSpec((1, C, tile_hw), in_map),
            ],
            out_specs=[
                pl.BlockSpec((1, C, 1), out_map),
                pl.BlockSpec((1, C, 1), out_map),
            ],
        ),
        compiler_params=pltpu.CompilerParams(
            dimension_semantics=("parallel", "arbitrary"),
            vmem_limit_bytes=48 * 1024 * 1024,            # fits v7x's 64 MiB physical VMEM
        ),
    )(xf, tf)

    # External combine (3 flops per channel): handles the P-way spatial split.
    inter = inter.reshape(N, P, C).sum(axis=1)
    denom = denom.reshape(N, P, C).sum(axis=1)
    loss = 1.0 - (2.0 * inter + SMOOTH_NR) / (denom + SMOOTH_DR)
    return loss.reshape(N, C, 1, 1)


def _reference(x, t):
    """Pure-JAX reference of the same forward (for a sanity check)."""
    C = x.shape[1]
    tf = t.astype(jnp.float32)
    probs = jnp.concatenate(
        [jax.nn.softmax(x[:, : C - 1], axis=1), jax.nn.sigmoid(x[:, C - 1:])],
        axis=1,
    )
    inter = jnp.sum(probs * tf, axis=(2, 3))
    denom = jnp.sum(tf, axis=(2, 3)) + jnp.sum(probs, axis=(2, 3))
    f = 1.0 - (2.0 * inter + SMOOTH_NR) / (denom + SMOOTH_DR)
    return f.reshape(x.shape[0], C, 1, 1)


if __name__ == "__main__":
    key = jax.random.PRNGKey(0)
    k_x, k_lab, k_bin, k_x2, k_lab2, k_bin2 = jax.random.split(key, 6)

    # --- case 1: N=2, C=4, 16x16, bf16 one-hot target (P=1 path) ---
    N, C, H, W = 2, 4, 16, 16
    x = jax.random.normal(k_x, (N, C, H, W), dtype=jnp.float32)
    labels = jax.random.randint(k_lab, (N, H, W), 0, C - 1)
    t_fg = jax.nn.one_hot(labels, C - 1, axis=1, dtype=jnp.bfloat16)
    t_last = (jax.random.uniform(k_bin, (N, 1, H, W)) > 0.5).astype(jnp.bfloat16)
    target = jnp.concatenate([t_fg, t_last], axis=1)

    ref = np.asarray(_reference(x, target))
    out_a = jax.block_until_ready(segmentation_loss(x, target))                    # single-tile fast path
    out_b = jax.block_until_ready(segmentation_loss(x, target, max_tile_hw=128))   # multi-step k accumulate
    assert out_a.shape == (N, C, 1, 1) and out_b.shape == (N, C, 1, 1)
    np.testing.assert_allclose(np.asarray(out_a), ref, rtol=1e-4, atol=1e-4)
    np.testing.assert_allclose(np.asarray(out_b), ref, rtol=1e-4, atol=1e-4)

    # --- case 2: N=1 (v7x megacore HW split, P=2), 24x24 (HW=576 -> masked tail), int8 target ---
    N2, H2, W2 = 1, 24, 24
    x2 = jax.random.normal(k_x2, (N2, C, H2, W2), dtype=jnp.float32)
    labels2 = jax.random.randint(k_lab2, (N2, H2, W2), 0, C - 1)
    t2_fg = jax.nn.one_hot(labels2, C - 1, axis=1, dtype=jnp.int8)
    t2_last = (jax.random.uniform(k_bin2, (N2, 1, H2, W2)) > 0.5).astype(jnp.int8)
    target2 = jnp.concatenate([t2_fg, t2_last], axis=1)

    ref2 = np.asarray(_reference(x2, target2))
    out_c = jax.block_until_ready(segmentation_loss(x2, target2))                    # tile=512, mask
    out_d = jax.block_until_ready(segmentation_loss(x2, target2, max_tile_hw=128))   # tile=128, mask + clamp
    assert out_c.shape == (N2, C, 1, 1) and out_d.shape == (N2, C, 1, 1)
    np.testing.assert_allclose(np.asarray(out_c), ref2, rtol=1e-4, atol=1e-4)
    np.testing.assert_allclose(np.asarray(out_d), ref2, rtol=1e-4, atol=1e-4)

    print("KERNEL_OK")
</pallas_src>

<mosaic_0001>
module attributes {stable_mosaic.version = 11 : i64} {
  func.func @_dice_partial_kernel(%arg0: i32, %arg1: i32, %arg2: memref<1x4x256xf32, #tpu.memory_space<vmem>>, %arg3: memref<1x4x256xbf16, #tpu.memory_space<vmem>>, %arg4: memref<1x4x1xf32, #tpu.memory_space<vmem>>, %arg5: memref<1x4x1xf32, #tpu.memory_space<vmem>>) attributes {dimension_semantics = [#tpu.dimension_semantics<parallel>, #tpu.dimension_semantics<arbitrary>], iteration_bounds = array<i64: 2, 1>, scalar_prefetch = 0 : i64, scratch_operands = 0 : i64, tpu.core_type = #tpu.core_type<tc>, window_params = [{transform_indices = @transform_0, window_bounds = array<i64: 1, 4, 256>}, {transform_indices = @transform_1, window_bounds = array<i64: 1, 4, 256>}, {transform_indices = @transform_2, window_bounds = array<i64: 1, 4, 1>}, {transform_indices = @transform_3, window_bounds = array<i64: 1, 4, 1>}]} {
    %c0_i32 = arith.constant 0 : i32
    %0 = arith.cmpi eq, %arg1, %c0_i32 : i32
    %1 = arith.extui %0 : i1 to i32
    %c0_i32_0 = arith.constant 0 : i32
    %2 = arith.cmpi ne, %1, %c0_i32_0 : i32
    scf.if %2 {
      %cst_40 = arith.constant 0.000000e+00 : f32
      %95 = vector.broadcast %cst_40 : f32 to vector<1x4x1xf32>
      %c0_41 = arith.constant 0 : index
      %c0_42 = arith.constant 0 : index
      %c0_43 = arith.constant 0 : index
      %96 = vector.load %arg4[%c0_41, %c0_42, %c0_43] : memref<1x4x1xf32, #tpu.memory_space<vmem>>, vector<1x4x1xf32>
      tpu.vector_store %arg4[%c0_41, %c0_42, %c0_43], %95 {strides = array<i32>} : memref<1x4x1xf32, #tpu.memory_space<vmem>>, vector<1x4x1xf32>,
      %cst_44 = arith.constant 0.000000e+00 : f32
      %97 = vector.broadcast %cst_44 : f32 to vector<1x4x1xf32>
      %c0_45 = arith.constant 0 : index
      %c0_46 = arith.constant 0 : index
      %c0_47 = arith.constant 0 : index
      %98 = vector.load %arg5[%c0_45, %c0_46, %c0_47] : memref<1x4x1xf32, #tpu.memory_space<vmem>>, vector<1x4x1xf32>
      tpu.vector_store %arg5[%c0_45, %c0_46, %c0_47], %97 {strides = array<i32>} : memref<1x4x1xf32, #tpu.memory_space<vmem>>, vector<1x4x1xf32>,
    } else {
    }
    %cst = arith.constant 0.000000e+00 : f32
    %3 = vector.broadcast %cst : f32 to vector<3x128xf32>
    %cst_1 = arith.constant 0.000000e+00 : f32
    %4 = vector.broadcast %cst_1 : f32 to vector<3x128xf32>
    %cst_2 = arith.constant 0.000000e+00 : f32
    %5 = vector.broadcast %cst_2 : f32 to vector<1x128xf32>
    %cst_3 = arith.constant 0.000000e+00 : f32
    %6 = vector.broadcast %cst_3 : f32 to vector<1x128xf32>
    %c0 = arith.constant 0 : index
    %c0_4 = arith.constant 0 : index
    %c0_5 = arith.constant 0 : index
    %7 = vector.load %arg2[%c0, %c0_4, %c0_5] : memref<1x4x256xf32, #tpu.memory_space<vmem>>, vector<1x4x128xf32>
    %8 = vector.shape_cast %7 : vector<1x4x128xf32> to vector<4x128xf32>
    %c0_6 = arith.constant 0 : index
    %c0_7 = arith.constant 0 : index
    %c0_8 = arith.constant 0 : index
    %9 = vector.load %arg3[%c0_6, %c0_7, %c0_8] : memref<1x4x256xbf16, #tpu.memory_space<vmem>>, vector<1x4x128xbf16>
    %10 = vector.shape_cast %9 : vector<1x4x128xbf16> to vector<4x128xbf16>
    %11 = arith.extf %10 : vector<4x128xbf16> to vector<4x128xf32>
    %12 = vector.extract_strided_slice %8 {offsets = [0, 0], sizes = [3, 128], strides = [1, 1]} : vector<4x128xf32> to vector<3x128xf32>
    %cst_9 = arith.constant dense<0xFF800000> : vector<128xf32>
    %13 = vector.multi_reduction <maximumf>, %12, %cst_9 [0] : vector<3x128xf32> to vector<128xf32>
    %14 = vector.shape_cast %13 : vector<128xf32> to vector<1x128xf32>
    %15 = vector.broadcast %14 : vector<1x128xf32> to vector<3x128xf32>
    %16 = arith.subf %12, %15 : vector<3x128xf32>
    %17 = math.exp %16 : vector<3x128xf32>
    %cst_10 = arith.constant dense<0.000000e+00> : vector<128xf32>
    %18 = vector.multi_reduction <add>, %17, %cst_10 [0] : vector<3x128xf32> to vector<128xf32>
    %19 = vector.shape_cast %18 : vector<128xf32> to vector<1x128xf32>
    %20 = vector.broadcast %19 : vector<1x128xf32> to vector<3x128xf32>
    %21 = arith.divf %17, %20 : vector<3x128xf32>
    %22 = vector.extract_strided_slice %8 {offsets = [3, 0], sizes = [1, 128], strides = [1, 1]} : vector<4x128xf32> to vector<1x128xf32>
    %cst_11 = arith.constant 5.000000e-01 : f32
    %23 = vector.broadcast %cst_11 : f32 to vector<1x128xf32>
    %24 = arith.mulf %23, %22 : vector<1x128xf32>
    %25 = math.tanh %24 : vector<1x128xf32>
    %cst_12 = arith.constant 1.000000e+00 : f32
    %26 = vector.broadcast %cst_12 : f32 to vector<1x128xf32>
    %27 = arith.addf %25, %26 : vector<1x128xf32>
    %cst_13 = arith.constant 5.000000e-01 : f32
    %28 = vector.broadcast %cst_13 : f32 to vector<1x128xf32>
    %29 = arith.mulf %28, %27 : vector<1x128xf32>
    %30 = vector.extract_strided_slice %11 {offsets = [0, 0], sizes = [3, 128], strides = [1, 1]} : vector<4x128xf32> to vector<3x128xf32>
    %31 = vector.extract_strided_slice %11 {offsets = [3, 0], sizes = [1, 128], strides = [1, 1]} : vector<4x128xf32> to vector<1x128xf32>
    %32 = arith.mulf %21, %30 : vector<3x128xf32>
    %33 = arith.addf %3, %32 : vector<3x128xf32>
    %34 = arith.addf %4, %21 : vector<3x128xf32>
    %35 = arith.addf %34, %30 : vector<3x128xf32>
    %36 = arith.mulf %29, %31 : vector<1x128xf32>
    %37 = arith.addf %5, %36 : vector<1x128xf32>
    %38 = arith.addf %6, %29 : vector<1x128xf32>
    %39 = arith.addf %38, %31 : vector<1x128xf32>
    %c0_14 = arith.constant 0 : index
    %c0_15 = arith.constant 0 : index
    %c128 = arith.constant 128 : index
    %40 = vector.load %arg2[%c0_14, %c0_15, %c128] : memref<1x4x256xf32, #tpu.memory_space<vmem>>, vector<1x4x128xf32>
    %41 = vector.shape_cast %40 : vector<1x4x128xf32> to vector<4x128xf32>
    %c0_16 = arith.constant 0 : index
    %c0_17 = arith.constant 0 : index
    %c128_18 = arith.constant 128 : index
    %42 = vector.load %arg3[%c0_16, %c0_17, %c128_18] : memref<1x4x256xbf16, #tpu.memory_space<vmem>>, vector<1x4x128xbf16>
    %43 = vector.shape_cast %42 : vector<1x4x128xbf16> to vector<4x128xbf16>
    %44 = arith.extf %43 : vector<4x128xbf16> to vector<4x128xf32>
    %45 = vector.extract_strided_slice %41 {offsets = [0, 0], sizes = [3, 128], strides = [1, 1]} : vector<4x128xf32> to vector<3x128xf32>
    %cst_19 = arith.constant dense<0xFF800000> : vector<128xf32>
    %46 = vector.multi_reduction <maximumf>, %45, %cst_19 [0] : vector<3x128xf32> to vector<128xf32>
    %47 = vector.shape_cast %46 : vector<128xf32> to vector<1x128xf32>
    %48 = vector.broadcast %47 : vector<1x128xf32> to vector<3x128xf32>
    %49 = arith.subf %45, %48 : vector<3x128xf32>
    %50 = math.exp %49 : vector<3x128xf32>
    %cst_20 = arith.constant dense<0.000000e+00> : vector<128xf32>
    %51 = vector.multi_reduction <add>, %50, %cst_20 [0] : vector<3x128xf32> to vector<128xf32>
    %52 = vector.shape_cast %51 : vector<128xf32> to vector<1x128xf32>
    %53 = vector.broadcast %52 : vector<1x128xf32> to vector<3x128xf32>
    %54 = arith.divf %50, %53 : vector<3x128xf32>
    %55 = vector.extract_strided_slice %41 {offsets = [3, 0], sizes = [1, 128], strides = [1, 1]} : vector<4x128xf32> to vector<1x128xf32>
    %cst_21 = arith.constant 5.000000e-01 : f32
    %56 = vector.broadcast %cst_21 : f32 to vector<1x128xf32>
    %57 = arith.mulf %56, %55 : vector<1x128xf32>
    %58 = math.tanh %57 : vector<1x128xf32>
    %cst_22 = arith.constant 1.000000e+00 : f32
    %59 = vector.broadcast %cst_22 : f32 to vector<1x128xf32>
    %60 = arith.addf %58, %59 : vector<1x128xf32>
    %cst_23 = arith.constant 5.000000e-01 : f32
    %61 = vector.broadcast %cst_23 : f32 to vector<1x128xf32>
    %62 = arith.mulf %61, %60 : vector<1x128xf32>
    %63 = vector.extract_strided_slice %44 {offsets = [0, 0], sizes = [3, 128], strides = [1, 1]} : vector<4x128xf32> to vector<3x128xf32>
    %64 = vector.extract_strided_slice %44 {offsets = [3, 0], sizes = [1, 128], strides = [1, 1]} : vector<4x128xf32> to vector<1x128xf32>
    %65 = arith.mulf %54, %63 : vector<3x128xf32>
    %66 = arith.addf %33, %65 : vector<3x128xf32>
    %67 = arith.addf %35, %54 : vector<3x128xf32>
    %68 = arith.addf %67, %63 : vector<3x128xf32>
    %69 = arith.mulf %62, %64 : vector<1x128xf32>
    %70 = arith.addf %37, %69 : vector<1x128xf32>
    %71 = arith.addf %39, %62 : vector<1x128xf32>
    %72 = arith.addf %71, %64 : vector<1x128xf32>
    %cst_24 = arith.constant dense<0.000000e+00> : vector<3xf32>
    %73 = vector.multi_reduction <add>, %66, %cst_24 [1] : vector<3x128xf32> to vector<3xf32>
    %74 = vector.shape_cast %73 : vector<3xf32> to vector<3x1xf32>
    %cst_25 = arith.constant dense<0.000000e+00> : vector<1xf32>
    %75 = vector.multi_reduction <add>, %70, %cst_25 [1] : vector<1x128xf32> to vector<1xf32>
    %76 = vector.shape_cast %75 : vector<1xf32> to vector<1x1xf32>
    %77 = tpu.concatenate %74, %76 in 0 : vector<3x1xf32>, vector<1x1xf32> -> vector<4x1xf32>
    %cst_26 = arith.constant dense<0.000000e+00> : vector<3xf32>
    %78 = vector.multi_reduction <add>, %68, %cst_26 [1] : vector<3x128xf32> to vector<3xf32>
    %79 = vector.shape_cast %78 : vector<3xf32> to vector<3x1xf32>
    %cst_27 = arith.constant dense<0.000000e+00> : vector<1xf32>
    %80 = vector.multi_reduction <add>, %72, %cst_27 [1] : vector<1x128xf32> to vector<1xf32>
    %81 = vector.shape_cast %80 : vector<1xf32> to vector<1x1xf32>
    %82 = tpu.concatenate %79, %81 in 0 : vector<3x1xf32>, vector<1x1xf32> -> vector<4x1xf32>
    %c0_28 = arith.constant 0 : index
    %c0_29 = arith.constant 0 : index
    %c0_30 = arith.constant 0 : index
    %83 = vector.load %arg4[%c0_28, %c0_29, %c0_30] : memref<1x4x1xf32, #tpu.memory_space<vmem>>, vector<1x4x1xf32>
    %84 = vector.shape_cast %83 : vector<1x4x1xf32> to vector<4x1xf32>
    %85 = arith.addf %84, %77 : vector<4x1xf32>
    %c0_31 = arith.constant 0 : index
    %c0_32 = arith.constant 0 : index
    %c0_33 = arith.constant 0 : index
    %86 = vector.load %arg4[%c0_31, %c0_32, %c0_33] : memref<1x4x1xf32, #tpu.memory_space<vmem>>, vector<1x4x1xf32>
    %87 = vector.shape_cast %86 : vector<1x4x1xf32> to vector<4x1xf32>
    %88 = vector.shape_cast %85 : vector<4x1xf32> to vector<1x4x1xf32>
    tpu.vector_store %arg4[%c0_31, %c0_32, %c0_33], %88 {strides = array<i32>} : memref<1x4x1xf32, #tpu.memory_space<vmem>>, vector<1x4x1xf32>,
    %c0_34 = arith.constant 0 : index
    %c0_35 = arith.constant 0 : index
    %c0_36 = arith.constant 0 : index
    %89 = vector.load %arg5[%c0_34, %c0_35, %c0_36] : memref<1x4x1xf32, #tpu.memory_space<vmem>>, vector<1x4x1xf32>
    %90 = vector.shape_cast %89 : vector<1x4x1xf32> to vector<4x1xf32>
    %91 = arith.addf %90, %82 : vector<4x1xf32>
    %c0_37 = arith.constant 0 : index
    %c0_38 = arith.constant 0 : index
    %c0_39 = arith.constant 0 : index
    %92 = vector.load %arg5[%c0_37, %c0_38, %c0_39] : memref<1x4x1xf32, #tpu.memory_space<vmem>>, vector<1x4x1xf32>
    %93 = vector.shape_cast %92 : vector<1x4x1xf32> to vector<4x1xf32>
    %94 = vector.shape_cast %91 : vector<4x1xf32> to vector<1x4x1xf32>
    tpu.vector_store %arg5[%c0_37, %c0_38, %c0_39], %94 {strides = array<i32>} : memref<1x4x1xf32, #tpu.memory_space<vmem>>, vector<1x4x1xf32>,
    return
  }
  func.func @transform_0(%arg0: i32, %arg1: i32) -> (i32, i32, i32) {
    %c0_i32 = arith.constant 0 : i32
    %c0_i32_0 = arith.constant 0 : i32
    return %arg0, %c0_i32, %arg1 : i32, i32, i32
  }
  func.func @transform_1(%arg0: i32, %arg1: i32) -> (i32, i32, i32) {
    %c0_i32 = arith.constant 0 : i32
    %c0_i32_0 = arith.constant 0 : i32
    return %arg0, %c0_i32, %arg1 : i32, i32, i32
  }
  func.func @transform_2(%arg0: i32, %arg1: i32) -> (i32, i32, i32) {
    %c0_i32 = arith.constant 0 : i32
    %c0_i32_0 = arith.constant 0 : i32
    %c0_i32_1 = arith.constant 0 : i32
    return %arg0, %c0_i32, %c0_i32_0 : i32, i32, i32
  }
  func.func @transform_3(%arg0: i32, %arg1: i32) -> (i32, i32, i32) {
    %c0_i32 = arith.constant 0 : i32
    %c0_i32_0 = arith.constant 0 : i32
    %c0_i32_1 = arith.constant 0 : i32
    return %arg0, %c0_i32, %c0_i32_0 : i32, i32, i32
  }
}

</mosaic_0001>

<llo_original>
// kernel: tpu_custom_call.1
$region0: #{tpu_custom_call.1}
  #allocation0 [shape = 'u32[]', space=smem, size = 0x4, offset = 0x4, fixed_abs, tag = 'smem constant byte address 0x4 - core index']
  #allocation1 [shape = 'u32[144,128]{1,0:T(1,128)}', space=vmem, size = 0x12000, scoped, tag = 'internal scratch']
  %s0 = inlined_call_operand.hbm [shape: f32[2,4,256], index: 0, kind: input, shape index: {}]
  %s1 = inlined_call_operand.hbm [shape: bf16[2,4,256], index: 1, kind: input, shape index: {}]
  %s2 = inlined_call_operand.vmem [shape: f32[2,4,1], index: 2, kind: output, shape index: {0}]
  %s3 = inlined_call_operand.vmem [shape: f32[2,4,1], index: 3, kind: output, shape index: {1}]
  %4 = xla_tuple %s2, %s3
  %s5 = sld [smem:[#allocation0]]
  $region61: #{tpu_custom_call.1} parent=0
    _
  %s7 = ssub.s32 1, %s5
  %s8 = scalar_select 0, %s7, %s5
  $region1: #{tpu_custom_call.1} parent=0
    #allocation2 [shape = 'u8[8192]{0}', space=vmem, size = 0x2000, scoped, tag = 'input window, operand 0']
    #allocation3 [shape = 's32[2]{0}', space=sflag, size = 0x8, scoped, tag = 'scoped memory for tpu_custom_call.1']
    #allocation4 [shape = 'u8[4096]{0}', space=vmem, size = 0x1000, scoped, tag = 'input window, operand 1']
    #allocation5 [shape = 's32[2]{0}', space=sflag, size = 0x8, scoped, tag = 'scoped memory for tpu_custom_call.1']
    %9 = vsyncpa [#allocation3], 0
    %s10 = scalar_lea.sflag [#allocation3], 1
    %11 = vsyncpa %s10, 0
    %12 = vsyncpa [#allocation5], 0
    %s13 = scalar_lea.sflag [#allocation5], 1
    %14 = vsyncpa %s13, 0
    loop: start=0, step=1, limit=4
    $region2: #{tpu_custom_call.1} parent=1 // loop_pre_header
      _
    $region3: #{tpu_custom_call.1} parent=1 // loop_header
      %s16 = sphi 0, %s20
      %p17 = scmp.ge.s32.totalorder %s16, 4
      %s23 = sphi 0, %s35
      %s24 = sphi 0, %s31
      %s25 = sphi 0, %s23
      %s26 = sphi 0, %s24
      %s27 = sphi 0, %s25
      %s28 = sphi 0, %s26
      %s40 = sphi 0, %s42
      %s43 = sphi 0, %s40
      %s44 = sphi 0, %s43
      %s60 = sphi 0, %s44
      %s68 = sphi 0, %s70
      %s71 = sphi 0, %s68
      %s72 = sphi 0, %s71
      %s88 = sphi 0, %s72
      %s94 = sphi 0, %s96
      %s97 = sphi 0, %s94
      %s98 = sphi 0, %s97
      %s114 = sphi 0, %s98
      %s120 = sphi 0, %s122
      %s123 = sphi 0, %s120
      %s124 = sphi 0, %s123
      %s140 = sphi 0, %s124
    $region4: #{tpu_custom_call.1} parent=1 // loop_header_branch
      %19 = sbr.rel (%p17) target = $region8
    $region5: #{tpu_custom_call.1} parent=1 // loop_body
      %s21 = ssub.s32 %s16, 1
      %s22 = ssub.s32 %s16, 2
      %s29 = sadd.s32 1, %s24
      %p30 = scmp.ge.s32.totalorder %s29, 1
      %s31 = scalar_select %p30, 0, %s29
      %s32 = sadd.s32 1, %s23
      %s33 = scalar_select %p30, %s32, %s23
      %p34 = scmp.ge.s32.totalorder %s33, 2
      %s35 = scalar_select %p34, 0, %s33
      %s36 = ssub.s32 %s23, %s35
      %s37 = ssub.s32 %s24, %s31
      %s38 = sor.u32 %s36, %s37
      %p39 = scmp.eq.s32.totalorder %s38, 0
      %s41 = sadd.s32 %s40, 1
      %s42 = scalar_select %p39, %s40, %s41
      %p45 = pneg %p39
      %p46 = scmp.eq.s32.totalorder %s16, 1
      %p47 = por %p45, %p46
      %p48 = scmp.ne.s32.totalorder %s40, %s43
      %p49 = scmp.eq.s32.totalorder %s16, 0
      %p50 = por %p48, %p49
      %p51 = scmp.ne.s32.totalorder %s40, %s43
      %p52 = scmp.eq.s32.totalorder %s21, 1
      %p53 = por %p51, %p52
      %p54 = scmp.ne.s32.totalorder %s43, %s44
      %p55 = scmp.eq.s32.totalorder %s21, 0
      %p56 = por %p54, %p55
      %p57 = scmp.ne.s32.totalorder %s43, %s44
      %p58 = scmp.eq.s32.totalorder %s22, 1
      %p59 = por %p57, %p58
      %p61 = scmp.ne.s32.totalorder %s44, %s60
      %p62 = scmp.eq.s32.totalorder %s22, 0
      %p63 = por %p61, %p62
      %s64 = ssub.s32 %s23, %s35
      %s65 = ssub.s32 %s24, %s31
      %s66 = sor.u32 %s64, %s65
      %p67 = scmp.eq.s32.totalorder %s66, 0
      %s69 = sadd.s32 %s68, 1
      %s70 = scalar_select %p67, %s68, %s69
      %p73 = pneg %p67
      %p74 = scmp.eq.s32.totalorder %s16, 1
      %p75 = por %p73, %p74
      %p76 = scmp.ne.s32.totalorder %s68, %s71
      %p77 = scmp.eq.s32.totalorder %s16, 0
      %p78 = por %p76, %p77
      %p79 = scmp.ne.s32.totalorder %s68, %s71
      %p80 = scmp.eq.s32.totalorder %s21, 1
      %p81 = por %p79, %p80
      %p82 = scmp.ne.s32.totalorder %s71, %s72
      %p83 = scmp.eq.s32.totalorder %s21, 0
      %p84 = por %p82, %p83
      %p85 = scmp.ne.s32.totalorder %s71, %s72
      %p86 = scmp.eq.s32.totalorder %s22, 1
      %p87 = por %p85, %p86
      %p89 = scmp.ne.s32.totalorder %s72, %s88
      %p90 = scmp.eq.s32.totalorder %s22, 0
      %p91 = por %p89, %p90
      %s92 = ssub.s32 %s23, %s35
      %p93 = scmp.eq.s32.totalorder %s92, 0
      %s95 = sadd.s32 %s94, 1
      %s96 = scalar_select %p93, %s94, %s95
      %p99 = pneg %p93
      %p100 = scmp.eq.s32.totalorder %s16, 1
      %p101 = por %p99, %p100
      %p102 = scmp.ne.s32.totalorder %s94, %s97
      %p103 = scmp.eq.s32.totalorder %s16, 0
      %p104 = por %p102, %p103
      %p105 = scmp.ne.s32.totalorder %s94, %s97
      %p106 = scmp.eq.s32.totalorder %s21, 1
      %p107 = por %p105, %p106
      %p108 = scmp.ne.s32.totalorder %s97, %s98
      %p109 = scmp.eq.s32.totalorder %s21, 0
      %p110 = por %p108, %p109
      %p111 = scmp.ne.s32.totalorder %s97, %s98
      %p112 = scmp.eq.s32.totalorder %s22, 1
      %p113 = por %p111, %p112
      %p115 = scmp.ne.s32.totalorder %s98, %s114
      %p116 = scmp.eq.s32.totalorder %s22, 0
      %p117 = por %p115, %p116
      %s118 = ssub.s32 %s23, %s35
      %p119 = scmp.eq.s32.totalorder %s118, 0
      %s121 = sadd.s32 %s120, 1
      %s122 = scalar_select %p119, %s120, %s121
      %p125 = pneg %p119
      %p126 = scmp.eq.s32.totalorder %s16, 1
      %p127 = por %p125, %p126
      %p128 = scmp.ne.s32.totalorder %s120, %s123
      %p129 = scmp.eq.s32.totalorder %s16, 0
      %p130 = por %p128, %p129
      %p131 = scmp.ne.s32.totalorder %s120, %s123
      %p132 = scmp.eq.s32.totalorder %s21, 1
      %p133 = por %p131, %p132
      %p134 = scmp.ne.s32.totalorder %s123, %s124
      %p135 = scmp.eq.s32.totalorder %s21, 0
      %p136 = por %p134, %p135
      %p137 = scmp.ne.s32.totalorder %s123, %s124
      %p138 = scmp.eq.s32.totalorder %s22, 1
      %p139 = por %p137, %p138
      %p141 = scmp.ne.s32.totalorder %s124, %s140
      %p142 = scmp.eq.s32.totalorder %s22, 0
      %p143 = por %p141, %p142
      %p144 = scmp.le.s32.totalorder 1, %s16
      %p145 = scmp.lt.s32.totalorder %s16, 3
      %p146 = pnand %p144, %p145
      %p147 = pneg %p146
      // Predicated region
      $region9: #{tpu_custom_call.1} parent=5 // pred_check
        _
      $region10: #{tpu_custom_call.1} parent=5 // pred_check_branch
        %149 = sbr.rel (%p146) target = $region12
      $region11: #{tpu_custom_call.1} parent=5 // pred_region
        %s150 = ssub.s32 %s16, 1
      $region12: #{tpu_custom_call.1} parent=5 // pred_fallthru
        _
      %p151 = scmp.lt.s32.totalorder %s16, 2
      // Predicated region
      $region13: #{tpu_custom_call.1} parent=5 // pred_check
        %p152 = pneg %p151
      $region14: #{tpu_custom_call.1} parent=5 // pred_check_branch
        %154 = sbr.rel (%p152) target = $region16
      $region15: #{tpu_custom_call.1} parent=5 // pred_region
        // Predicated region
        $region17: #{tpu_custom_call.1} parent=15 // pred_check
          %p155 = pneg %p50
        $region18: #{tpu_custom_call.1} parent=15 // pred_check_branch
          %157 = sbr.rel (%p155) target = $region20
        $region19: #{tpu_custom_call.1} parent=15 // pred_region
          %s158 = sand.u32 %s40, 1
          %s159 = scalar_lea.sflag [#allocation3], %s158
          %s160 = sand.u32 %s40, 1
          %s161 = smul.addr %s160, 8
          %s162 = scalar_lea.vmem [#allocation2], %s161
          %s163 = smul.u32 2, %s24
          %s165 = ssub.s32 128, 128
          %166 = vsyncadd %s159, %s165
          %s167 = smul.addr %s23, 2
          %s168 = sadd.s32 %s163, %s167
          %s169 = smul.addr %s168, 64
          %s170 = scalar_lea.hbm %s0, %s169
          %s172 = sshll.u32 %s162, 4
          %s173 = int_to_ptr.vmem [resolvable:$true] %s172
          %175 = dma.hbm_to_vmem [thread:$0]  %s170, 128, %s173, %s159
        $region20: #{tpu_custom_call.1} parent=15 // pred_fallthru
          _
        // Predicated region
        $region21: #{tpu_custom_call.1} parent=15 // pred_check
          %p176 = pneg %p78
        $region22: #{tpu_custom_call.1} parent=15 // pred_check_branch
          %178 = sbr.rel (%p176) target = $region24
        $region23: #{tpu_custom_call.1} parent=15 // pred_region
          %s179 = sand.u32 %s68, 1
          %s180 = scalar_lea.sflag [#allocation5], %s179
          %s181 = sand.u32 %s68, 1
          %s182 = smul.addr %s181, 4
          %s183 = scalar_lea.vmem [#allocation4], %s182
          %s184 = smul.u32 2, %s24
          %s186 = ssub.s32 64, 64
          %187 = vsyncadd %s180, %s186
          %s188 = smul.addr %s23, 2
          %s189 = sadd.s32 %s184, %s188
          %s190 = smul.addr %s189, 32
          %s191 = scalar_lea.hbm %s1, %s190
          %s193 = sshll.u32 %s183, 4
          %s194 = int_to_ptr.vmem [resolvable:$true] %s193
          %196 = dma.hbm_to_vmem [thread:$0]  %s191, 64, %s194, %s180
        $region24: #{tpu_custom_call.1} parent=15 // pred_fallthru
          _
      $region16: #{tpu_custom_call.1} parent=5 // pred_fallthru
        _
      %p197 = scmp.le.s32.totalorder 1, %s16
      %p198 = scmp.lt.s32.totalorder %s16, 3
      %p199 = pnand %p197, %p198
      %p200 = pneg %p199
      // Predicated region
      $region25: #{tpu_custom_call.1} parent=5 // pred_check
        _
      $region26: #{tpu_custom_call.1} parent=5 // pred_check_branch
        %202 = sbr.rel (%p199) target = $region28
      $region27: #{tpu_custom_call.1} parent=5 // pred_region
        %s203 = ssub.s32 %s16, 1
        %s204 = sand.u32 %s43, 1
        %s205 = scalar_lea.sflag [#allocation3], %s204
        %s206 = sand.u32 %s43, 1
        %s207 = smul.addr %s206, 8
        %s208 = scalar_lea.vmem [#allocation2], %s207
        // Predicated region
        $region29: #{tpu_custom_call.1} parent=27 // pred_check
          %p209 = pneg %p56
        $region30: #{tpu_custom_call.1} parent=27 // pred_check_branch
          %211 = sbr.rel (%p209) target = $region32
        $region31: #{tpu_custom_call.1} parent=27 // pred_region
          %212 = dma.done %s205, 128
        $region32: #{tpu_custom_call.1} parent=27 // pred_fallthru
          _
        %s213 = sand.u32 %s71, 1
        %s214 = scalar_lea.sflag [#allocation5], %s213
        %s215 = sand.u32 %s71, 1
        %s216 = smul.addr %s215, 4
        %s217 = scalar_lea.vmem [#allocation4], %s216
        // Predicated region
        $region33: #{tpu_custom_call.1} parent=27 // pred_check
          %p218 = pneg %p84
        $region34: #{tpu_custom_call.1} parent=27 // pred_check_branch
          %220 = sbr.rel (%p218) target = $region36
        $region35: #{tpu_custom_call.1} parent=27 // pred_region
          %221 = dma.done %s214, 64
        $region36: #{tpu_custom_call.1} parent=27 // pred_fallthru
          _
        %s222 = sand.u32 %s43, 1
        %s223 = scalar_lea.sflag [#allocation3], %s222
        %s224 = sand.u32 %s43, 1
        %s225 = smul.addr %s224, 8
        %s226 = scalar_lea.vmem [#allocation2], %s225
        %p227 = pneg %p56
        %p228 = pneg %p53
        %s229 = sand.u32 %s71, 1
        %s230 = scalar_lea.sflag [#allocation5], %s229
        %s231 = sand.u32 %s71, 1
        %s232 = smul.addr %s231, 4
        %s233 = scalar_lea.vmem [#allocation4], %s232
        %p234 = pneg %p84
        %p235 = pneg %p81
        %p236 = pneg %p110
        %p237 = pneg %p107
        %p238 = scmp.lt.s32.totalorder %s25, 1
        %s239 = scalar_select %p238, %s25, 1
        %s240 = smul.addr %s239, 4
        %s241 = scalar_lea.vmem %s2, %s240
        %p242 = pneg %p136
        %p243 = pneg %p133
        %p244 = scmp.lt.s32.totalorder %s25, 1
        %s245 = scalar_select %p244, %s25, 1
        %s246 = smul.addr %s245, 4
        %s247 = scalar_lea.vmem %s3, %s246
        %s248 = smul.u32 2, %s26
        %s249 = smul.u32 2, %s26
        %p250 = scmp.lt.s32.totalorder %s25, 1
        %s251 = scalar_select %p250, %s25, 1
        %s252 = smul.addr %s251, 4
        %s253 = scalar_lea.vmem %s2, %s252
        %p254 = scmp.lt.s32.totalorder %s25, 1
        %s255 = scalar_select %p254, %s25, 1
        %s256 = smul.addr %s255, 4
        %s257 = scalar_lea.vmem %s3, %s256
        %p258 = scmp.eq.s32.totalorder %s26, 0
        // Predicated region
        $region37: #{tpu_custom_call.1} parent=27 // pred_check
          %p259 = pneg %p258
        $region38: #{tpu_custom_call.1} parent=27 // pred_check_branch
          %261 = sbr.rel (%p259) target = $region40
        $region39: #{tpu_custom_call.1} parent=27 // pred_region
          %vm262 = vcmask 3072
          %263 = vst.msk [vmem:[%s253] sm:$0xf] %vm262, 0.0
          %264 = vst.msk [vmem:[%s257] sm:$0xf] %vm262, 0.0
        $region40: #{tpu_custom_call.1} parent=27 // pred_fallthru
          _
        %v265 = vld [vmem:[%s208] sm:$0xf]
        %v266 = vld [vmem:[%s217] sm:$0x3]
        %v267 = vunpack.c.l.bf16 %v266
        %vm268 = vcmask 1042432
        %v269 = vsel %vm268, %v265, -inf
        %v270 = vrot.slane %v269, 4
        %v271 = vmax.f32 %v269, %v270
        %v272 = vrot.slane %v271, 2
        %v273 = vmax.f32 %v271, %v272
        %v274 = vrot.slane %v273, 1
        %v275 = vmax.f32 %v273, %v274
        %v276 = vsub.f32 %v265, %v275
        %v277 = vmul.f32 %v276, 1.442695
        %v278 = vpow.pop %v277
        %v279 = vsel %vm268, %v278, 0.0
        %v280 = vrot.slane %v279, 4
        %v281 = vadd.f32 %v279, %v280
        %v282 = vrot.slane %v281, 2
        %v283 = vadd.f32 %v281, %v282
        %v284 = vrot.slane %v283, 1
        %v285 = vadd.f32 %v283, %v284
        %v286 = vrcp.pop %v285
        %v287 = vmul.f32 %v278, %v286
        %v288 = vmul.f32 %v265, 0.5
        %v289 = vtanh.pop %v288
        %v290 = vadd.f32 %v289, 1.0
        %v291 = vmul.f32 %v290, 0.5
        %v292 = vmul.f32 %v287, %v267
        %v293 = vadd.f32 %v292, 0.0
        %v294 = vadd.f32 %v287, 0.0
        %v295 = vadd.f32 %v294, %v267
        %v296 = vmul.f32 %v291, %v267
        %v297 = vadd.f32 %v296, 0.0
        %v298 = vadd.f32 %v291, 0.0
        %v299 = vadd.f32 %v298, %v267
        %v300 = vld [vmem:[%s208 + $0x4] sm:$0xf]
        %v301 = vld [vmem:[%s217 + $0x2] sm:$0x3]
        %v302 = vunpack.c.l.bf16 %v301
        %v303 = vsel %vm268, %v300, -inf
        %v304 = vrot.slane %v303, 4
        %v305 = vmax.f32 %v303, %v304
        %v306 = vrot.slane %v305, 2
        %v307 = vmax.f32 %v305, %v306
        %v308 = vrot.slane %v307, 1
        %v309 = vmax.f32 %v307, %v308
        %v310 = vsub.f32 %v300, %v309
        %v311 = vmul.f32 %v310, 1.442695
        %v312 = vpow.pop %v311
        %v313 = vsel %vm268, %v312, 0.0
        %v314 = vrot.slane %v313, 4
        %v315 = vadd.f32 %v313, %v314
        %v316 = vrot.slane %v315, 2
        %v317 = vadd.f32 %v315, %v316
        %v318 = vrot.slane %v317, 1
        %v319 = vadd.f32 %v317, %v318
        %v320 = vrcp.pop %v319
        %v321 = vmul.f32 %v312, %v320
        %v322 = vmul.f32 %v300, 0.5
        %v323 = vtanh.pop %v322
        %v324 = vadd.f32 %v323, 1.0
        %v325 = vmul.f32 %v324, 0.5
        %v326 = vmul.f32 %v321, %v302
        %v327 = vadd.f32 %v293, %v326
        %v328 = vadd.f32 %v295, %v321
        %v329 = vadd.f32 %v328, %v302
        %v330 = vmul.f32 %v325, %v302
        %v331 = vadd.f32 %v297, %v330
        %v332 = vadd.f32 %v299, %v325
        %v333 = vadd.f32 %v332, %v302
        %v334 = vsel %vm268, %v327, 0.0
        %335 = vadd.xlane.f32.xlu0 %v334
        %v336 = vpop.xlane.xlu0 %335
        %vm337 = vcmask 1043459
        %v338 = vsel %vm337, %v331, 0.0
        %339 = vadd.xlane.f32.xlu0 %v338
        %v340 = vpop.xlane.xlu0 %339
        %v341 = vsel %vm268, %v336, %v340
        %v342 = vsel %vm268, %v329, 0.0
        %343 = vadd.xlane.f32.xlu0 %v342
        %v344 = vpop.xlane.xlu0 %343
        %v345 = vsel %vm337, %v333, 0.0
        %346 = vadd.xlane.f32.xlu0 %v345
        %v347 = vpop.xlane.xlu0 %346
        %v348 = vsel %vm268, %v344, %v347
        %v349 = vld [vmem:[%s253] sm:$0xf]
        %v350 = vadd.f32 %v349, %v341
        %vm351 = vcmask 3072
        %352 = vst.msk [vmem:[%s253] sm:$0xf] %vm351, %v350
        %v353 = vld [vmem:[%s257] sm:$0xf]
        %v354 = vadd.f32 %v353, %v348
        %355 = vst.msk [vmem:[%s257] sm:$0xf] %vm351, %v354
        %p356 = scmp.lt.s32.totalorder %s25, 1
        %s357 = scalar_select %p356, %s25, 1
        %s358 = smul.addr %s357, 4
        %s359 = scalar_lea.vmem %s2, %s358
        %p360 = scmp.lt.s32.totalorder %s25, 1
        %s361 = scalar_select %p360, %s25, 1
        %s362 = smul.addr %s361, 4
        %s363 = scalar_lea.vmem %s3, %s362
        // Predicated region
        $region41: #{tpu_custom_call.1} parent=27 // pred_check
          %p364 = pneg %p107
        $region42: #{tpu_custom_call.1} parent=27 // pred_check_branch
          %366 = sbr.rel (%p364) target = $region44
        $region43: #{tpu_custom_call.1} parent=27 // pred_region
          _
        $region44: #{tpu_custom_call.1} parent=27 // pred_fallthru
          _
        // Predicated region
        $region45: #{tpu_custom_call.1} parent=27 // pred_check
          %p367 = pneg %p133
        $region46: #{tpu_custom_call.1} parent=27 // pred_check_branch
          %369 = sbr.rel (%p367) target = $region48
        $region47: #{tpu_custom_call.1} parent=27 // pred_region
          _
        $region48: #{tpu_custom_call.1} parent=27 // pred_fallthru
          _
      $region28: #{tpu_custom_call.1} parent=5 // pred_fallthru
        _
      %p370 = scmp.le.s32.totalorder 2, %s16
      // Predicated region
      $region49: #{tpu_custom_call.1} parent=5 // pred_check
        %p371 = pneg %p370
      $region50: #{tpu_custom_call.1} parent=5 // pred_check_branch
        %373 = sbr.rel (%p371) target = $region52
      $region51: #{tpu_custom_call.1} parent=5 // pred_region
        %s374 = ssub.s32 %s16, 2
        // Predicated region
        $region53: #{tpu_custom_call.1} parent=51 // pred_check
          %p375 = pneg %p113
        $region54: #{tpu_custom_call.1} parent=51 // pred_check_branch
          %377 = sbr.rel (%p375) target = $region56
        $region55: #{tpu_custom_call.1} parent=51 // pred_region
          %p378 = scmp.lt.s32.totalorder %s27, 1
          %s379 = scalar_select %p378, %s27, 1
          %s380 = smul.addr %s379, 4
          %s381 = scalar_lea.vmem %s2, %s380
        $region56: #{tpu_custom_call.1} parent=51 // pred_fallthru
          _
        // Predicated region
        $region57: #{tpu_custom_call.1} parent=51 // pred_check
          %p382 = pneg %p139
        $region58: #{tpu_custom_call.1} parent=51 // pred_check_branch
          %384 = sbr.rel (%p382) target = $region60
        $region59: #{tpu_custom_call.1} parent=51 // pred_region
          %p385 = scmp.lt.s32.totalorder %s27, 1
          %s386 = scalar_select %p385, %s27, 1
          %s387 = smul.addr %s386, 4
          %s388 = scalar_lea.vmem %s3, %s387
        $region60: #{tpu_custom_call.1} parent=51 // pred_fallthru
          _
      $region52: #{tpu_custom_call.1} parent=5 // pred_fallthru
        _
    $region6: #{tpu_custom_call.1} parent=1 // loop_footer
      %s20 = sadd.s32 1, %s16
    $region7: #{tpu_custom_call.1} parent=1 // loop_footer_branch
      %15 = sbr.rel target = $region3
    $region8: #{tpu_custom_call.1} parent=1 // loop_exit
      _
    %389 = vsyncpa [#allocation3], 1
    %s390 = scalar_lea.sflag [#allocation3], 1
    %391 = vsyncpa %s390, 1
    %392 = vsyncpa [#allocation5], 1
    %s393 = scalar_lea.sflag [#allocation5], 1
    %394 = vsyncpa %s393, 1

</llo_original>
